<compile_context>
chip_gen: v7x
topology: tpu7x:2x2x1
jax: 0.10.0
libtpu: 0.0.40
codegen_flags: <defaults>
</compile_context>

<pallas_src>
from functools import partial

import jax
import jax.numpy as jnp
from jax.experimental import pallas as pl
from jax.experimental.pallas import tpu as pltpu


# ----------------------------------------------------------------------------
# Kernels
# ----------------------------------------------------------------------------

def _cgm_fused_kernel(gamma_ref, feat_ref, map_ref, o_ref):
    """Single pass: dot over full HW + sigmoid gate + residual, one block."""
    feat = feat_ref[0].astype(jnp.float32)                     # (tc, HW)
    m = map_ref[0, pl.ds(1, 1), :].astype(jnp.float32)         # (1, HW) = map ch 1
    att = jnp.sum(feat * m, axis=-1, keepdims=True)            # (tc, 1) VPU+XLU
    gate = 1.0 + gamma_ref[0, 0] * jax.nn.sigmoid(att)         # (tc, 1) EUP
    o_ref[0] = (feat * gate).astype(o_ref.dtype)               # lane-dense store


def _cgm_reduce_kernel(gamma_ref, feat_ref, map_ref, gate_ref, acc_ref):
    """Pass 1 of the HW-tiled path: accumulate per-channel <feat, map1>."""
    h = pl.program_id(2)

    @pl.when(h == 0)
    def _():
        acc_ref[...] = jnp.zeros_like(acc_ref)

    feat = feat_ref[0].astype(jnp.float32)                     # (tc, thw)
    m = map_ref[0, pl.ds(1, 1), :].astype(jnp.float32)         # (1, thw)
    acc_ref[...] += jnp.sum(feat * m, axis=-1, keepdims=True)  # (tc, 1)

    @pl.when(h == pl.num_programs(2) - 1)
    def _():
        gate_ref[0] = 1.0 + gamma_ref[0, 0] * jax.nn.sigmoid(acc_ref[...])


def _cgm_apply_kernel(gate_ref, feat_ref, o_ref):
    """Pass 2 of the HW-tiled path: apply the precomputed gate + residual."""
    gate = gate_ref[0]                                         # (tc, 1) f32
    o_ref[0] = (feat_ref[0].astype(jnp.float32) * gate).astype(o_ref.dtype)


# ----------------------------------------------------------------------------
# Tile selection (trace-time Python; shapes are static)
# ----------------------------------------------------------------------------

def _pick_channel_tile(B, C, HW, itemsize, max_block_bytes):
    """Channel tile for the single-pass kernel, or None if no full-HW tile fits."""
    divs8 = [d for d in range(8, C + 1, 8) if C % d == 0]
    fitting = [d for d in divs8 if d * HW * itemsize <= max_block_bytes]
    if C * HW * itemsize <= max_block_bytes and C not in fitting:
        fitting.append(C)  # the full channel dim is always a legal block size
    if not fitting:
        return None
    tc = max(fitting)
    # v7x megacore: with B == 1 make sure the grid has >= 2 parallel steps.
    if B * (C // tc) < 2:
        halves = [d for d in fitting if d % 8 == 0 and d <= C // 2]
        if halves:
            tc = max(halves)
    return tc


def _pick_two_pass_tiles(C, HW, itemsize, max_block_bytes):
    """(tc, thw) for the HW-tiled two-pass path, or None if HW can't be tiled."""
    c_divs = [d for d in range(8, C + 1, 8) if C % d == 0] or [C]
    hw_divs = [t for t in range(128, HW, 128) if HW % t == 0]
    if not hw_divs:
        return None
    best = None
    for tc in c_divs:
        fits = [t for t in hw_divs if tc * t * itemsize <= max_block_bytes]
        if not fits:
            continue
        cand = (tc, max(fits))
        if (best is None
                or cand[0] * cand[1] > best[0] * best[1]
                or (cand[0] * cand[1] == best[0] * best[1] and cand[0] > best[0])):
            best = cand
    return best


# ----------------------------------------------------------------------------
# Wrapper
# ----------------------------------------------------------------------------

# Safe on every generation: 32 MiB scoped VMEM (<= physical on v5e/v6e/v7x),
# 2 MiB blocks -> ~4x block double-buffer footprint stays under ~9 MiB.
_VMEM_LIMIT_BYTES = 32 << 20


@partial(jax.jit, static_argnames=("max_block_bytes",))
def cgm_forward(feature, seg_map, gamma, *, max_block_bytes=2 << 20):
    """feature: (B, C, H, W); seg_map: (B, Cm>=2, H, W); gamma: scalar param."""
    B, C, H, W = feature.shape
    Cm = seg_map.shape[1]
    HW = H * W
    dtype = feature.dtype
    itemsize = jnp.dtype(dtype).itemsize

    feat = feature.reshape(B, C, HW)           # native dtype, no copy pass
    smap = seg_map.reshape(B, Cm, HW)          # full map; channel 1 picked in-kernel
    gamma2d = jnp.reshape(gamma, (1, 1)).astype(jnp.float32)

    tc = _pick_channel_tile(B, C, HW, itemsize, max_block_bytes)
    tiles = None if tc is not None else _pick_two_pass_tiles(C, HW, itemsize,
                                                             max_block_bytes)
    if tc is None and tiles is None:
        # TODO(synk): HW is too large for a full-HW tile but not a multiple of
        # 128, so it cannot be lane-tiled cleanly; best-effort single pass with
        # the smallest legal channel tile (may exceed the VMEM budget).
        divs8 = [d for d in range(8, C + 1, 8) if C % d == 0]
        tc = min(divs8) if divs8 else C

    if tc is not None:
        # ---- single-pass fused kernel -------------------------------------
        out = pl.pallas_call(
            _cgm_fused_kernel,
            out_shape=jax.ShapeDtypeStruct((B, C, HW), dtype),
            grid=(B, C // tc),
            in_specs=[
                pl.BlockSpec(memory_space=pltpu.MemorySpace.SMEM),       # gamma
                pl.BlockSpec((1, tc, HW), lambda b, c: (b, c, 0)),       # feature
                pl.BlockSpec((1, Cm, HW), lambda b, c: (b, 0, 0)),       # seg map
            ],
            out_specs=pl.BlockSpec((1, tc, HW), lambda b, c: (b, c, 0)),
            compiler_params=pltpu.CompilerParams(
                dimension_semantics=("parallel", "parallel"),
                vmem_limit_bytes=_VMEM_LIMIT_BYTES),
        )(gamma2d, feat, smap)
        return out.reshape(B, C, H, W)

    # ---- two-pass HW-tiled path (large resolutions) ------------------------
    tc, thw = tiles
    nhw = HW // thw

    gate = pl.pallas_call(
        _cgm_reduce_kernel,
        out_shape=jax.ShapeDtypeStruct((B, C, 1), jnp.float32),
        grid=(B, C // tc, nhw),
        in_specs=[
            pl.BlockSpec(memory_space=pltpu.MemorySpace.SMEM),           # gamma
            pl.BlockSpec((1, tc, thw), lambda b, c, h: (b, c, h)),       # feature
            pl.BlockSpec((1, Cm, thw), lambda b, c, h: (b, 0, h)),       # seg map
        ],
        out_specs=pl.BlockSpec((1, tc, 1), lambda b, c, h: (b, c, 0)),
        scratch_shapes=[pltpu.VMEM((tc, 1), jnp.float32)],
        compiler_params=pltpu.CompilerParams(
            dimension_semantics=("parallel", "parallel", "arbitrary"),
            vmem_limit_bytes=_VMEM_LIMIT_BYTES),
    )(gamma2d, feat, smap)

    out = pl.pallas_call(
        _cgm_apply_kernel,
        out_shape=jax.ShapeDtypeStruct((B, C, HW), dtype),
        grid=(B, C // tc, nhw),
        in_specs=[
            pl.BlockSpec((1, tc, 1), lambda b, c, h: (b, c, 0)),         # gate
            pl.BlockSpec((1, tc, thw), lambda b, c, h: (b, c, h)),       # feature
        ],
        out_specs=pl.BlockSpec((1, tc, thw), lambda b, c, h: (b, c, h)),
        compiler_params=pltpu.CompilerParams(
            dimension_semantics=("parallel", "parallel", "parallel"),
            vmem_limit_bytes=_VMEM_LIMIT_BYTES),
    )(gate, feat)
    return out.reshape(B, C, H, W)


# ----------------------------------------------------------------------------
# Pure-JAX reference (mirrors the PyTorch module; computed in f32)
# ----------------------------------------------------------------------------

def cgm_reference(feature, seg_map, gamma):
    f = feature.astype(jnp.float32)
    m = seg_map.astype(jnp.float32)[:, 1, :, :]                 # (B, H, W)
    att = jnp.einsum("bchw,bhw->bc", f, m)                      # (B, C)
    att = jax.nn.sigmoid(att)[:, :, None, None]                 # (B, C, 1, 1)
    return jnp.float32(gamma) * att * f + f


# ----------------------------------------------------------------------------

if __name__ == "__main__":
    key = jax.random.PRNGKey(0)
    k_feat, k_map, k_feat2, k_map2 = jax.random.split(key, 4)

    # --- test 1: f32, B=2 (single-pass fused path) ---------------------------
    B, C, H, W = 2, 32, 16, 16
    feature = jax.random.normal(k_feat, (B, C, H, W), jnp.float32)
    seg_map = jax.nn.softmax(
        jax.random.normal(k_map, (B, 2, H, W), jnp.float32), axis=1)
    gamma = jnp.float32(0.5)   # nonzero so the gated path is actually exercised

    out = cgm_forward(feature, seg_map, gamma)
    jax.block_until_ready(out)
    ref = cgm_reference(feature, seg_map, gamma)
    assert out.shape == (B, C, H, W) and out.dtype == feature.dtype
    assert bool(jnp.all(jnp.isfinite(out)))
    assert bool(jnp.allclose(out, ref, atol=1e-4, rtol=1e-4)), \
        f"max abs err {float(jnp.max(jnp.abs(out - ref)))}"

    # --- test 2: bf16, B=1 (native-dtype path + megacore channel split) ------
    feature_b = jax.random.normal(k_feat2, (1, C, H, W), jnp.bfloat16)
    seg_map_b = jax.nn.softmax(
        jax.random.normal(k_map2, (1, 2, H, W), jnp.float32), axis=1
    ).astype(jnp.bfloat16)
    out_b = cgm_forward(feature_b, seg_map_b, gamma)
    jax.block_until_ready(out_b)
    ref_b = cgm_reference(feature_b, seg_map_b, gamma)
    assert out_b.dtype == jnp.bfloat16
    assert bool(jnp.allclose(out_b.astype(jnp.float32), ref_b,
                             atol=3e-2, rtol=3e-2))

    # --- test 3: tiny VMEM budget -> exercises the HW-tiled two-pass path ----
    out_t = cgm_forward(feature, seg_map, gamma, max_block_bytes=4096)
    jax.block_until_ready(out_t)
    assert bool(jnp.allclose(out_t, ref, atol=1e-4, rtol=1e-4)), \
        f"max abs err {float(jnp.max(jnp.abs(out_t - ref)))}"

    print("KERNEL_OK")
</pallas_src>

<mosaic_0001>
module attributes {stable_mosaic.version = 11 : i64} {
  func.func @_cgm_fused_kernel(%arg0: i32, %arg1: i32, %arg2: memref<1x1xf32, #tpu.memory_space<smem>>, %arg3: memref<1x32x256xf32, #tpu.memory_space<vmem>>, %arg4: memref<1x2x256xf32, #tpu.memory_space<vmem>>, %arg5: memref<1x32x256xf32, #tpu.memory_space<vmem>>) attributes {dimension_semantics = [#tpu.dimension_semantics<parallel>, #tpu.dimension_semantics<parallel>], iteration_bounds = array<i64: 2, 1>, scalar_prefetch = 0 : i64, scratch_operands = 0 : i64, tpu.core_type = #tpu.core_type<tc>, window_params = [{transform_indices = @transform_0, window_bounds = array<i64: 1, 1>}, {transform_indices = @transform_1, window_bounds = array<i64: 1, 32, 256>}, {transform_indices = @transform_2, window_bounds = array<i64: 1, 2, 256>}, {transform_indices = @transform_3, window_bounds = array<i64: 1, 32, 256>}]} {
    %c0 = arith.constant 0 : index
    %c0_0 = arith.constant 0 : index
    %c0_1 = arith.constant 0 : index
    %0 = vector.load %arg3[%c0, %c0_0, %c0_1] : memref<1x32x256xf32, #tpu.memory_space<vmem>>, vector<1x32x256xf32>
    %1 = vector.shape_cast %0 : vector<1x32x256xf32> to vector<32x256xf32>
    %c0_2 = arith.constant 0 : index
    %c1 = arith.constant 1 : index
    %c0_3 = arith.constant 0 : index
    %2 = vector.load %arg4[%c0_2, %c1, %c0_3] : memref<1x2x256xf32, #tpu.memory_space<vmem>>, vector<1x1x256xf32>
    %3 = vector.shape_cast %2 : vector<1x1x256xf32> to vector<1x256xf32>
    %4 = vector.broadcast %3 : vector<1x256xf32> to vector<32x256xf32>
    %5 = arith.mulf %1, %4 : vector<32x256xf32>
    %cst = arith.constant dense<0.000000e+00> : vector<32xf32>
    %6 = vector.multi_reduction <add>, %5, %cst [1] : vector<32x256xf32> to vector<32xf32>
    %7 = vector.shape_cast %6 : vector<32xf32> to vector<32x1xf32>
    %c0_4 = arith.constant 0 : index
    %c0_5 = arith.constant 0 : index
    %8 = memref.load %arg2[%c0_4, %c0_5] : memref<1x1xf32, #tpu.memory_space<smem>>
    %9 = arith.negf %7 : vector<32x1xf32>
    %10 = math.exp %9 : vector<32x1xf32>
    %cst_6 = arith.constant 1.000000e+00 : f32
    %11 = vector.broadcast %cst_6 : f32 to vector<32x1xf32>
    %12 = arith.addf %11, %10 : vector<32x1xf32>
    %13 = arith.divf %11, %12 : vector<32x1xf32>
    %14 = vector.broadcast %8 : f32 to vector<32x1xf32>
    %15 = arith.mulf %14, %13 : vector<32x1xf32>
    %cst_7 = arith.constant 1.000000e+00 : f32
    %16 = vector.broadcast %cst_7 : f32 to vector<32x1xf32>
    %17 = arith.addf %16, %15 : vector<32x1xf32>
    %18 = vector.broadcast %17 : vector<32x1xf32> to vector<32x256xf32>
    %19 = arith.mulf %1, %18 : vector<32x256xf32>
    %c0_8 = arith.constant 0 : index
    %c0_9 = arith.constant 0 : index
    %c0_10 = arith.constant 0 : index
    %20 = vector.load %arg5[%c0_8, %c0_9, %c0_10] : memref<1x32x256xf32, #tpu.memory_space<vmem>>, vector<1x32x256xf32>
    %21 = vector.shape_cast %20 : vector<1x32x256xf32> to vector<32x256xf32>
    %22 = vector.shape_cast %19 : vector<32x256xf32> to vector<1x32x256xf32>
    tpu.vector_store %arg5[%c0_8, %c0_9, %c0_10], %22 {strides = array<i32>} : memref<1x32x256xf32, #tpu.memory_space<vmem>>, vector<1x32x256xf32>,
    return
  }
  func.func @transform_0(%arg0: i32, %arg1: i32) -> (i32, i32) {
    %c0_i32 = arith.constant 0 : i32
    %c0_i32_0 = arith.constant 0 : i32
    %c0_i32_1 = arith.constant 0 : i32
    return %c0_i32, %c0_i32_0 : i32, i32
  }
  func.func @transform_1(%arg0: i32, %arg1: i32) -> (i32, i32, i32) {
    %c0_i32 = arith.constant 0 : i32
    %c0_i32_0 = arith.constant 0 : i32
    return %arg0, %arg1, %c0_i32 : i32, i32, i32
  }
  func.func @transform_2(%arg0: i32, %arg1: i32) -> (i32, i32, i32) {
    %c0_i32 = arith.constant 0 : i32
    %c0_i32_0 = arith.constant 0 : i32
    %c0_i32_1 = arith.constant 0 : i32
    return %arg0, %c0_i32, %c0_i32_0 : i32, i32, i32
  }
  func.func @transform_3(%arg0: i32, %arg1: i32) -> (i32, i32, i32) {
    %c0_i32 = arith.constant 0 : i32
    %c0_i32_0 = arith.constant 0 : i32
    return %arg0, %arg1, %c0_i32 : i32, i32, i32
  }
}

</mosaic_0001>

<llo_original>
// kernel: cgm_forward.1
$region0: #{cgm_forward.1}
  #allocation0 [shape = 'u32[]', space=smem, size = 0x4, offset = 0x4, fixed_abs, tag = 'smem constant byte address 0x4 - core index']
  #allocation1 [shape = 'u32[144,128]{1,0:T(1,128)}', space=vmem, size = 0x12000, scoped, tag = 'internal scratch']
  #allocation2 [shape = 'f32[1,1]{1,0:T(1,128)S(6)}', space=smem, size = 0x200, scoped, tag = 'scoped memory for cgm_forward.1']
  %s0 = inlined_call_operand.<no memory space> [shape: f32[1,1], index: 0, kind: input, shape index: {}]
  %s1 = inlined_call_operand.vmem [shape: f32[2,32,256], index: 1, kind: input, shape index: {}]
  %s2 = inlined_call_operand.vmem [shape: f32[2,2,256], index: 2, kind: input, shape index: {}]
  %s3 = inlined_call_operand.vmem [shape: f32[2,32,256], index: 3, kind: output, shape index: {}]
  %s4 = sld [smem:[#allocation0]]
  $region45: #{cgm_forward.1} parent=0
    _
  %s6 = ssub.s32 1, %s4
  %s7 = scalar_select 0, %s6, %s4
  %8 = sst [smem:[#allocation2]] %s0
  loop: start=0, step=1, limit=4
  $region2: #{cgm_forward.1} parent=0 // loop_pre_header
    _
  $region3: #{cgm_forward.1} parent=0 // loop_header
    %s10 = sphi 0, %s14
    %p11 = scmp.ge.s32.totalorder %s10, 4
    %s17 = sphi 0, %s29
    %s18 = sphi 0, %s25
    %s19 = sphi 0, %s17
    %s20 = sphi 0, %s18
    %s21 = sphi 0, %s19
    %s22 = sphi 0, %s20
    %s30 = sphi 0, %s30
    %s32 = sphi 0, %s30
    %s33 = sphi 0, %s32
    %s47 = sphi 0, %s33
    %s55 = sphi 0, %s57
    %s58 = sphi 0, %s55
    %s59 = sphi 0, %s58
    %s75 = sphi 0, %s59
    %s81 = sphi 0, %s83
    %s84 = sphi 0, %s81
    %s85 = sphi 0, %s84
    %s101 = sphi 0, %s85
    %s109 = sphi 0, %s111
    %s112 = sphi 0, %s109
    %s113 = sphi 0, %s112
    %s129 = sphi 0, %s113
  $region4: #{cgm_forward.1} parent=0 // loop_header_branch
    %13 = sbr.rel (%p11) target = $region8
  $region5: #{cgm_forward.1} parent=0 // loop_body
    %s15 = ssub.s32 %s10, 1
    %s16 = ssub.s32 %s10, 2
    %s23 = sadd.s32 1, %s18
    %p24 = scmp.ge.s32.totalorder %s23, 1
    %s25 = scalar_select %p24, 0, %s23
    %s26 = sadd.s32 1, %s17
    %s27 = scalar_select %p24, %s26, %s17
    %p28 = scmp.ge.s32.totalorder %s27, 2
    %s29 = scalar_select %p28, 0, %s27
    %s31 = sadd.s32 %s30, 1
    %p34 = scmp.eq.s32.totalorder %s10, 1
    %p35 = scmp.ne.s32.totalorder %s30, %s32
    %p36 = scmp.eq.s32.totalorder %s10, 0
    %p37 = por %p35, %p36
    %p38 = scmp.ne.s32.totalorder %s30, %s32
    %p39 = scmp.eq.s32.totalorder %s15, 1
    %p40 = por %p38, %p39
    %p41 = scmp.ne.s32.totalorder %s32, %s33
    %p42 = scmp.eq.s32.totalorder %s15, 0
    %p43 = por %p41, %p42
    %p44 = scmp.ne.s32.totalorder %s32, %s33
    %p45 = scmp.eq.s32.totalorder %s16, 1
    %p46 = por %p44, %p45
    %p48 = scmp.ne.s32.totalorder %s33, %s47
    %p49 = scmp.eq.s32.totalorder %s16, 0
    %p50 = por %p48, %p49
    %s51 = ssub.s32 %s17, %s29
    %s52 = ssub.s32 %s18, %s25
    %s53 = sor.u32 %s51, %s52
    %p54 = scmp.eq.s32.totalorder %s53, 0
    %s56 = sadd.s32 %s55, 1
    %s57 = scalar_select %p54, %s55, %s56
    %p60 = pneg %p54
    %p61 = scmp.eq.s32.totalorder %s10, 1
    %p62 = por %p60, %p61
    %p63 = scmp.ne.s32.totalorder %s55, %s58
    %p64 = scmp.eq.s32.totalorder %s10, 0
    %p65 = por %p63, %p64
    %p66 = scmp.ne.s32.totalorder %s55, %s58
    %p67 = scmp.eq.s32.totalorder %s15, 1
    %p68 = por %p66, %p67
    %p69 = scmp.ne.s32.totalorder %s58, %s59
    %p70 = scmp.eq.s32.totalorder %s15, 0
    %p71 = por %p69, %p70
    %p72 = scmp.ne.s32.totalorder %s58, %s59
    %p73 = scmp.eq.s32.totalorder %s16, 1
    %p74 = por %p72, %p73
    %p76 = scmp.ne.s32.totalorder %s59, %s75
    %p77 = scmp.eq.s32.totalorder %s16, 0
    %p78 = por %p76, %p77
    %s79 = ssub.s32 %s17, %s29
    %p80 = scmp.eq.s32.totalorder %s79, 0
    %s82 = sadd.s32 %s81, 1
    %s83 = scalar_select %p80, %s81, %s82
    %p86 = pneg %p80
    %p87 = scmp.eq.s32.totalorder %s10, 1
    %p88 = por %p86, %p87
    %p89 = scmp.ne.s32.totalorder %s81, %s84
    %p90 = scmp.eq.s32.totalorder %s10, 0
    %p91 = por %p89, %p90
    %p92 = scmp.ne.s32.totalorder %s81, %s84
    %p93 = scmp.eq.s32.totalorder %s15, 1
    %p94 = por %p92, %p93
    %p95 = scmp.ne.s32.totalorder %s84, %s85
    %p96 = scmp.eq.s32.totalorder %s15, 0
    %p97 = por %p95, %p96
    %p98 = scmp.ne.s32.totalorder %s84, %s85
    %p99 = scmp.eq.s32.totalorder %s16, 1
    %p100 = por %p98, %p99
    %p102 = scmp.ne.s32.totalorder %s85, %s101
    %p103 = scmp.eq.s32.totalorder %s16, 0
    %p104 = por %p102, %p103
    %s105 = ssub.s32 %s17, %s29
    %s106 = ssub.s32 %s18, %s25
    %s107 = sor.u32 %s105, %s106
    %p108 = scmp.eq.s32.totalorder %s107, 0
    %s110 = sadd.s32 %s109, 1
    %s111 = scalar_select %p108, %s109, %s110
    %p114 = pneg %p108
    %p115 = scmp.eq.s32.totalorder %s10, 1
    %p116 = por %p114, %p115
    %p117 = scmp.ne.s32.totalorder %s109, %s112
    %p118 = scmp.eq.s32.totalorder %s10, 0
    %p119 = por %p117, %p118
    %p120 = scmp.ne.s32.totalorder %s109, %s112
    %p121 = scmp.eq.s32.totalorder %s15, 1
    %p122 = por %p120, %p121
    %p123 = scmp.ne.s32.totalorder %s112, %s113
    %p124 = scmp.eq.s32.totalorder %s15, 0
    %p125 = por %p123, %p124
    %p126 = scmp.ne.s32.totalorder %s112, %s113
    %p127 = scmp.eq.s32.totalorder %s16, 1
    %p128 = por %p126, %p127
    %p130 = scmp.ne.s32.totalorder %s113, %s129
    %p131 = scmp.eq.s32.totalorder %s16, 0
    %p132 = por %p130, %p131
    %p133 = scmp.le.s32.totalorder 1, %s10
    %p134 = scmp.lt.s32.totalorder %s10, 3
    %p135 = pnand %p133, %p134
    %p136 = pneg %p135
    // Predicated region
    $region9: #{cgm_forward.1} parent=5 // pred_check
      _
    $region10: #{cgm_forward.1} parent=5 // pred_check_branch
      %138 = sbr.rel (%p135) target = $region12
    $region11: #{cgm_forward.1} parent=5 // pred_region
      %s139 = ssub.s32 %s10, 1
      // Predicated region
      $region13: #{cgm_forward.1} parent=11 // pred_check
        %p140 = pneg %p43
      $region14: #{cgm_forward.1} parent=11 // pred_check_branch
        %142 = sbr.rel (%p140) target = $region16
      $region15: #{cgm_forward.1} parent=11 // pred_region
        _
      $region16: #{cgm_forward.1} parent=11 // pred_fallthru
        _
    $region12: #{cgm_forward.1} parent=5 // pred_fallthru
      _
    %p143 = scmp.lt.s32.totalorder %s10, 2
    // Predicated region
    $region17: #{cgm_forward.1} parent=5 // pred_check
      %p144 = pneg %p143
    $region18: #{cgm_forward.1} parent=5 // pred_check_branch
      %146 = sbr.rel (%p144) target = $region20
    $region19: #{cgm_forward.1} parent=5 // pred_region
      // Predicated region
      $region21: #{cgm_forward.1} parent=19 // pred_check
        %p147 = pneg %p65
      $region22: #{cgm_forward.1} parent=19 // pred_check_branch
        %149 = sbr.rel (%p147) target = $region24
      $region23: #{cgm_forward.1} parent=19 // pred_region
        %s150 = smul.u32 4, %s18
        %p151 = scmp.lt.s32.totalorder %s17, 1
        %s152 = scalar_select %p151, %s17, 1
        %p153 = scmp.lt.s32.totalorder %s150, 3
        %s154 = scalar_select %p153, %s150, 3
        %s155 = smul.addr %s154, 2
        %s156 = smul.addr %s152, 8
        %s157 = sadd.s32 %s155, %s156
        %s158 = smul.addr %s157, 8
        %s159 = scalar_lea.vmem %s1, %s158
        %s160 = smul.u32 4, %s18
      $region24: #{cgm_forward.1} parent=19 // pred_fallthru
        _
      // Predicated region
      $region25: #{cgm_forward.1} parent=19 // pred_check
        %p161 = pneg %p91
      $region26: #{cgm_forward.1} parent=19 // pred_check_branch
        %163 = sbr.rel (%p161) target = $region28
      $region27: #{cgm_forward.1} parent=19 // pred_region
        %p164 = scmp.lt.s32.totalorder %s17, 1
        %s165 = scalar_select %p164, %s17, 1
        %s166 = smul.addr %s165, 2
        %s167 = smul.addr %s166, 2
        %s168 = scalar_lea.vmem %s2, %s167
      $region28: #{cgm_forward.1} parent=19 // pred_fallthru
        _
    $region20: #{cgm_forward.1} parent=5 // pred_fallthru
      _
    %p169 = scmp.le.s32.totalorder 1, %s10
    %p170 = scmp.lt.s32.totalorder %s10, 3
    %p171 = pnand %p169, %p170
    %p172 = pneg %p171
    // Predicated region
    $region29: #{cgm_forward.1} parent=5 // pred_check
      _
    $region30: #{cgm_forward.1} parent=5 // pred_check_branch
      %174 = sbr.rel (%p171) target = $region32
    $region31: #{cgm_forward.1} parent=5 // pred_region
      %s175 = ssub.s32 %s10, 1
      %p176 = pneg %p43
      %p177 = pneg %p40
      %s178 = smul.u32 4, %s20
      %p179 = scmp.lt.s32.totalorder %s19, 1
      %s180 = scalar_select %p179, %s19, 1
      %p181 = scmp.lt.s32.totalorder %s178, 3
      %s182 = scalar_select %p181, %s178, 3
      %s183 = smul.addr %s182, 2
      %s184 = smul.addr %s180, 8
      %s185 = sadd.s32 %s183, %s184
      %s186 = smul.addr %s185, 8
      %s187 = scalar_lea.vmem %s1, %s186
      %p188 = pneg %p71
      %p189 = pneg %p68
      %p190 = scmp.lt.s32.totalorder %s19, 1
      %s191 = scalar_select %p190, %s19, 1
      %s192 = smul.addr %s191, 2
      %s193 = smul.addr %s192, 2
      %s194 = scalar_lea.vmem %s2, %s193
      %p195 = pneg %p97
      %p196 = pneg %p94
      %p197 = pneg %p125
      %p198 = pneg %p122
      %s199 = smul.u32 4, %s20
      %p200 = scmp.lt.s32.totalorder %s19, 1
      %s201 = scalar_select %p200, %s19, 1
      %p202 = scmp.lt.s32.totalorder %s199, 3
      %s203 = scalar_select %p202, %s199, 3
      %s204 = smul.addr %s203, 2
      %s205 = smul.addr %s201, 8
      %s206 = sadd.s32 %s204, %s205
      %s207 = smul.addr %s206, 8
      %s208 = scalar_lea.vmem %s3, %s207
      %s209 = smul.u32 4, %s20
      %p210 = scmp.lt.s32.totalorder %s19, 1
      %s211 = scalar_select %p210, %s19, 1
      %p212 = scmp.lt.s32.totalorder %s209, 3
      %s213 = scalar_select %p212, %s209, 3
      %s214 = smul.addr %s213, 2
      %s215 = smul.addr %s211, 8
      %s216 = sadd.s32 %s214, %s215
      %s217 = smul.addr %s216, 8
      %s218 = scalar_lea.vmem %s1, %s217
      %s219 = smul.u32 4, %s20
      %p220 = scmp.lt.s32.totalorder %s19, 1
      %s221 = scalar_select %p220, %s19, 1
      %s222 = smul.addr %s221, 2
      %s223 = smul.addr %s222, 2
      %s224 = scalar_lea.vmem %s2, %s223
      %s225 = smul.u32 4, %s20
      %p226 = scmp.lt.s32.totalorder %s19, 1
      %s227 = scalar_select %p226, %s19, 1
      %p228 = scmp.lt.s32.totalorder %s225, 3
      %s229 = scalar_select %p228, %s225, 3
      %s230 = smul.addr %s229, 2
      %s231 = smul.addr %s227, 8
      %s232 = sadd.s32 %s230, %s231
      %s233 = smul.addr %s232, 8
      %s234 = scalar_lea.vmem %s3, %s233
      %s235 = smul.u32 4, %s20
      %v236 = vld [vmem:[%s218] sm:$0xff]
      %v237 = vld [vmem:[%s218 + $0x8] sm:$0xff]
      %v238 = vld [vmem:[%s218 + $0x10] sm:$0xff]
      %v239 = vld [vmem:[%s218 + $0x18] sm:$0xff]
      %v240 = vld [vmem:[%s218 + $0x20] sm:$0xff]
      %v241 = vld [vmem:[%s218 + $0x28] sm:$0xff]
      %v242 = vld [vmem:[%s218 + $0x30] sm:$0xff]
      %v243 = vld [vmem:[%s218 + $0x38] sm:$0xff]
      %s244 = scalar_lea.vmem %s224, 1
      %v245 = vld [vmem:[%s244] ss:$2 sm:$0x3]
      %v247 = vlaneseq
      %v248 = vshrl.u32 %v247, 7
      %v249 = vsub.s32 0, %v248
      %v250 = vrot.slane %v245, %v249
      %v251 = vlaneseq
      %v252 = vshrl.u32 %v251, 7
      %v253 = vsub.s32 1, %v252
      %v254 = vrot.slane %v245, %v253
      %v257 = vmul.f32 %v236, %v250
      %v258 = vmul.f32 %v237, %v254
      %v259 = vmul.f32 %v238, %v250
      %v260 = vmul.f32 %v239, %v254
      %v261 = vmul.f32 %v240, %v250
      %v262 = vmul.f32 %v241, %v254
      %v263 = vmul.f32 %v242, %v250
      %v264 = vmul.f32 %v243, %v254
      %v265 = vadd.f32 %v257, %v258
      %266 = vadd.xlane.f32.xlu0 %v265
      %v267 = vpop.xlane.xlu0 %266
      %v268 = vadd.f32 %v259, %v260
      %269 = vadd.xlane.f32.xlu0 %v268
      %v270 = vpop.xlane.xlu0 %269
      %v271 = vadd.f32 %v261, %v262
      %272 = vadd.xlane.f32.xlu0 %v271
      %v273 = vpop.xlane.xlu0 %272
      %v274 = vadd.f32 %v263, %v264
      %275 = vadd.xlane.f32.xlu0 %v274
      %v276 = vpop.xlane.xlu0 %275
      %s277 = sld [smem:[#allocation2]]
      %v278 = vxor.u32 %v267, 2147483648
      %v279 = vxor.u32 %v270, 2147483648
      %v280 = vxor.u32 %v273, 2147483648
      %v281 = vxor.u32 %v276, 2147483648
      %v282 = vmul.f32 %v278, 1.442695
      %v283 = vpow.pop %v282
      %v284 = vmul.f32 %v279, 1.442695
      %v285 = vpow.pop %v284
      %v286 = vmul.f32 %v280, 1.442695
      %v287 = vpow.pop %v286
      %v288 = vmul.f32 %v281, 1.442695
      %v289 = vpow.pop %v288
      %v290 = vadd.f32 %v283, 1.0
      %v291 = vadd.f32 %v285, 1.0
      %v292 = vadd.f32 %v287, 1.0
      %v293 = vadd.f32 %v289, 1.0
      %v294 = vrcp.pop %v290
      %v295 = vmul.f32 1.0, %v294
      %v296 = vrcp.pop %v291
      %v297 = vmul.f32 1.0, %v296
      %v298 = vrcp.pop %v292
      %v299 = vmul.f32 1.0, %v298
      %v300 = vrcp.pop %v293
      %v301 = vmul.f32 1.0, %v300
      %v302 = vstv %s277
      %v303 = vmul.f32 %v302, %v295
      %v304 = vmul.f32 %v302, %v297
      %v305 = vmul.f32 %v302, %v299
      %v306 = vmul.f32 %v302, %v301
      %v307 = vadd.f32 %v303, 1.0
      %v308 = vadd.f32 %v304, 1.0
      %v309 = vadd.f32 %v305, 1.0
      %v310 = vadd.f32 %v306, 1.0
      %v311 = vmul.f32 %v236, %v307
      %v312 = vmul.f32 %v237, %v307
      %v313 = vmul.f32 %v238, %v308
      %v314 = vmul.f32 %v239, %v308
      %v315 = vmul.f32 %v240, %v309
      %v316 = vmul.f32 %v241, %v309
      %v317 = vmul.f32 %v242, %v310
      %v318 = vmul.f32 %v243, %v310
      %319 = vst [vmem:[%s234] sm:$0xff] %v311
      %320 = vst [vmem:[%s234 + $0x8] sm:$0xff] %v312
      %321 = vst [vmem:[%s234 + $0x10] sm:$0xff] %v313
      %322 = vst [vmem:[%s234 + $0x18] sm:$0xff] %v314
      %323 = vst [vmem:[%s234 + $0x20] sm:$0xff] %v315
      %324 = vst [vmem:[%s234 + $0x28] sm:$0xff] %v316
      %325 = vst [vmem:[%s234 + $0x30] sm:$0xff] %v317
      %326 = vst [vmem:[%s234 + $0x38] sm:$0xff] %v318
      %s327 = smul.u32 4, %s20
      %p328 = scmp.lt.s32.totalorder %s19, 1
      %s329 = scalar_select %p328, %s19, 1
      %p330 = scmp.lt.s32.totalorder %s327, 3
      %s331 = scalar_select %p330, %s327, 3
      %s332 = smul.addr %s331, 2
      %s333 = smul.addr %s329, 8
      %s334 = sadd.s32 %s332, %s333
      %s335 = smul.addr %s334, 8
      %s336 = scalar_lea.vmem %s3, %s335
      // Predicated region
      $region33: #{cgm_forward.1} parent=31 // pred_check
        %p337 = pneg %p122
      $region34: #{cgm_forward.1} parent=31 // pred_check_branch
        %339 = sbr.rel (%p337) target = $region36
      $region35: #{cgm_forward.1} parent=31 // pred_region
        %s340 = smul.u32 4, %s20
      $region36: #{cgm_forward.1} parent=31 // pred_fallthru
        _
    $region32: #{cgm_forward.1} parent=5 // pred_fallthru
      _
    %p341 = scmp.le.s32.totalorder 2, %s10
    // Predicated region
    $region37: #{cgm_forward.1} parent=5 // pred_check
      %p342 = pneg %p341
    $region38: #{cgm_forward.1} parent=5 // pred_check_branch
      %344 = sbr.rel (%p342) target = $region40
    $region39: #{cgm_forward.1} parent=5 // pred_region
      %s345 = ssub.s32 %s10, 2
      // Predicated region
      $region41: #{cgm_forward.1} parent=39 // pred_check
        %p346 = pneg %p128
      $region42: #{cgm_forward.1} parent=39 // pred_check_branch
        %348 = sbr.rel (%p346) target = $region44
      $region43: #{cgm_forward.1} parent=39 // pred_region
        %s349 = smul.u32 4, %s22
        %p350 = scmp.lt.s32.totalorder %s21, 1
        %s351 = scalar_select %p350, %s21, 1
        %p352 = scmp.lt.s32.totalorder %s349, 3
        %s353 = scalar_select %p352, %s349, 3
        %s354 = smul.addr %s353, 2
        %s355 = smul.addr %s351, 8
        %s356 = sadd.s32 %s354, %s355
        %s357 = smul.addr %s356, 8
        %s358 = scalar_lea.vmem %s3, %s357
      $region44: #{cgm_forward.1} parent=39 // pred_fallthru
        _
    $region40: #{cgm_forward.1} parent=5 // pred_fallthru
      _
  $region6: #{cgm_forward.1} parent=0 // loop_footer
    %s14 = sadd.s32 1, %s10
  $region7: #{cgm_forward.1} parent=0 // loop_footer_branch
    %9 = sbr.rel target = $region3
  $region8: #{cgm_forward.1} parent=0 // loop_exit
    _

</llo_original>
